<compile_context>
chip_gen: v6e
topology: v6e:2x2x1
jax: 0.10.0
libtpu: 0.0.40
codegen_flags: <defaults>
</compile_context>

<pallas_src>
import functools

import jax
import jax.numpy as jnp
from jax import lax
from jax.experimental import pallas as pl
from jax.experimental.pallas import tpu as pltpu

LEAKY_SLOPE = 0.01   # nn.LeakyReLU default
BN_EPS = 1e-5


def _instance_counter_kernel(x_ref, w1t_ref, aux_ref, out_ref, *, H, W):
    """One batch item per grid step.

    x_ref:   (1, Cpad, S)   channels (zero-padded to 8) on sublanes, S=H*W on lanes
    w1t_ref: (Cout, 9*Cpad) BN-folded 3x3 conv weights; col = tap*Cpad + channel
    aux_ref: (Cout, 3)      [:,0]=folded conv bias, [:,1]=w2@w3, [:,2]=b2@w3+b3
    out_ref: (1, 1, 1)      sigmoid output for this batch item
    """
    Cpad = x_ref.shape[1]
    S = x_ref.shape[2]                               # H * W
    # lane pad width: multiple of 128 and >= W+1 so every out-of-row tap access
    # lands in the zero pad (or is removed by the column mask below).
    PADW = ((W + 1 + 127) // 128) * 128

    x = x_ref[0]                                     # (Cpad, S)
    aux = aux_ref[...]                               # (Cout, 3)

    zpad = jnp.zeros((Cpad, PADW), jnp.float32)
    xe = jnp.concatenate([zpad, x, zpad], axis=1)    # (Cpad, S + 2*PADW), aligned

    col = lax.broadcasted_iota(jnp.int32, (Cpad, S), 1) % W

    # im2col: 9 lane-shifted (masked) views stacked along the channel/sublane axis.
    taps = []
    for dy in range(3):
        for dx in range(3):
            oy, ox = dy - 1, dx - 1
            off = PADW + oy * W + ox                 # static lane offset
            patch = xe[:, off:off + S]               # (Cpad, S)
            if ox == -1:                             # left neighbor: mask col 0
                patch = jnp.where(col >= 1, patch, 0.0)
            elif ox == 1:                            # right neighbor: mask col W-1
                patch = jnp.where(col < W - 1, patch, 0.0)
            taps.append(patch)
    im2col = jnp.concatenate(taps, axis=0)           # (9*Cpad, S), 8-aligned pieces

    # 3x3 conv (BN + bias folded into weights): single MXU contraction.
    conv = jnp.dot(w1t_ref[...], im2col,
                   preferred_element_type=jnp.float32)   # (Cout, S)
    conv = conv + aux[:, 0:1]                        # folded conv-bias + BN shift
    act = jnp.where(conv >= 0, conv, LEAKY_SLOPE * conv)

    # 1x1 conv + AdaptiveAvgPool + Linear collapsed: weighted spatial mean.
    weighted = act * aux[:, 1:2]                     # * (w2 @ w3) per channel
    tot = jnp.sum(weighted, axis=1, keepdims=True)   # (Cout, 1)  lane reduce
    tot = jnp.sum(tot, axis=0, keepdims=True)        # (1, 1)     sublane reduce
    logit = tot * (1.0 / S) + aux[0:1, 2:3]          # + (b2 @ w3 + b3)
    out_ref[...] = jax.nn.sigmoid(logit).reshape(1, 1, 1).astype(out_ref.dtype)


@jax.jit
def instance_counter_forward(x_nchw, fused):
    """NCHW input, folded params -> (N, 1) sigmoid output."""
    N, Cin, H, W = x_nchw.shape
    S = H * W
    w1t = fused["w1t"]
    aux = fused["aux"]
    Cout = w1t.shape[0]
    Cpad = w1t.shape[1] // 9

    # Free reshape of the contiguous NCHW tensor (no transpose / no spatial pad
    # in HBM); channels rounded up to the sublane multiple (layout plumbing).
    x = x_nchw.reshape(N, Cin, S).astype(jnp.float32)
    if Cpad != Cin:
        x = jnp.pad(x, ((0, 0), (0, Cpad - Cin), (0, 0)))

    kern = functools.partial(_instance_counter_kernel, H=H, W=W)
    out = pl.pallas_call(
        kern,
        out_shape=jax.ShapeDtypeStruct((N, 1, 1), jnp.float32),
        grid=(N,),
        in_specs=[
            pl.BlockSpec((1, Cpad, S), lambda n: (n, 0, 0)),
            pl.BlockSpec((Cout, 9 * Cpad), lambda n: (0, 0)),
            pl.BlockSpec((Cout, 3), lambda n: (0, 0)),
        ],
        out_specs=pl.BlockSpec((1, 1, 1), lambda n: (n, 0, 0)),
        compiler_params=pltpu.CompilerParams(
            # batch axis shards across the 2 TensorCores on v7x; sequential loop
            # on v5e/v6e.  (VMEM use per step is a few KB, no limit override
            # needed; set vmem_limit_bytes here if this is scaled up on v5e.)
            dimension_semantics=("parallel",),
        ),
    )(x, w1t, aux)
    return out.reshape(N, 1)


def make_params(key, in_ch, out_ch):
    """Deterministic synthetic parameters (shapes match the PyTorch module)."""
    ks = jax.random.split(key, 10)
    w1_hwio = 0.1 * jax.random.normal(ks[0], (3, 3, in_ch, out_ch), jnp.float32)
    b1 = 0.1 * jax.random.normal(ks[1], (out_ch,), jnp.float32)
    gamma = 1.0 + 0.1 * jax.random.normal(ks[2], (out_ch,), jnp.float32)
    beta = 0.1 * jax.random.normal(ks[3], (out_ch,), jnp.float32)
    run_mean = 0.1 * jax.random.normal(ks[4], (out_ch,), jnp.float32)
    run_var = jnp.abs(jax.random.normal(ks[5], (out_ch,), jnp.float32)) + 0.5
    w2 = 0.1 * jax.random.normal(ks[6], (out_ch, out_ch), jnp.float32)   # 1x1 conv
    b2 = 0.1 * jax.random.normal(ks[7], (out_ch,), jnp.float32)
    w3 = 0.1 * jax.random.normal(ks[8], (out_ch, 1), jnp.float32)        # Linear
    b3 = 0.1 * jax.random.normal(ks[9], (1,), jnp.float32)
    return dict(w1_hwio=w1_hwio, b1=b1, gamma=gamma, beta=beta,
                run_mean=run_mean, run_var=run_var, w2=w2, b2=b2, w3=w3, b3=b3)


def fold_params(p):
    """One-time algebraic folding of BN / 1x1-conv / pool / Linear (outside hot path)."""
    kh, kw, cin, cout = p["w1_hwio"].shape
    cpad = ((cin + 7) // 8) * 8                              # sublane round-up
    bn_scale = p["gamma"] / jnp.sqrt(p["run_var"] + BN_EPS)
    bn_shift = p["beta"] - p["run_mean"] * bn_scale
    w1_folded = p["w1_hwio"] * bn_scale                      # (3,3,Cin,Cout)
    w1_folded = jnp.pad(w1_folded, ((0, 0), (0, 0), (0, cpad - cin), (0, 0)))
    w1t = w1_folded.reshape(kh * kw * cpad, cout).T          # (Cout, 9*Cpad)
    b1_folded = p["b1"] * bn_scale + bn_shift                # (Cout,)
    w23 = p["w2"] @ p["w3"]                                  # (Cout, 1)
    b23 = (p["b2"] @ p["w3"] + p["b3"])[0]                   # scalar
    aux = jnp.concatenate(
        [b1_folded[:, None], w23, jnp.full((cout, 1), b23, jnp.float32)], axis=1)
    return {"w1t": w1t.astype(jnp.float32), "aux": aux.astype(jnp.float32)}


def reference_forward(x_nchw, p):
    """Pure-JAX reference (unfolded params) for numerical verification."""
    x = jnp.transpose(x_nchw, (0, 2, 3, 1)).astype(jnp.float32)
    y = lax.conv_general_dilated(x, p["w1_hwio"], (1, 1), "SAME",
                                 dimension_numbers=("NHWC", "HWIO", "NHWC"))
    y = y + p["b1"]
    scale = p["gamma"] / jnp.sqrt(p["run_var"] + BN_EPS)
    shift = p["beta"] - p["run_mean"] * scale
    y = y * scale + shift
    y = jnp.where(y >= 0, y, LEAKY_SLOPE * y)
    y = jnp.einsum("nhwc,cd->nhwd", y, p["w2"]) + p["b2"]
    y = jnp.mean(y, axis=(1, 2))
    logit = y @ p["w3"] + p["b3"]
    return jax.nn.sigmoid(logit)


if __name__ == "__main__":
    # InstanceCounter(input_n_filters=4, out=8); x: NCHW = (2, 4, 16, 16)
    key = jax.random.PRNGKey(0)
    kx, kp = jax.random.split(key)
    x = jax.random.normal(kx, (2, 4, 16, 16), jnp.float32)
    params = make_params(kp, in_ch=4, out_ch=8)
    fused = fold_params(params)

    out = jax.block_until_ready(instance_counter_forward(x, fused))
    ref = jax.block_until_ready(reference_forward(x, params))

    assert out.shape == (2, 1), out.shape
    assert jnp.allclose(out, ref, rtol=1e-4, atol=1e-5), (out, ref)
    print("KERNEL_OK")
</pallas_src>

<mosaic_0001>
module attributes {stable_mosaic.version = 11 : i64} {
  func.func @_instance_counter_kernel(%arg0: i32, %arg1: memref<1x8x256xf32, #tpu.memory_space<vmem>>, %arg2: memref<8x72xf32, #tpu.memory_space<vmem>>, %arg3: memref<8x3xf32, #tpu.memory_space<vmem>>, %arg4: memref<1x1x1xf32, #tpu.memory_space<vmem>>) attributes {dimension_semantics = [#tpu.dimension_semantics<parallel>], iteration_bounds = array<i64: 2>, scalar_prefetch = 0 : i64, scratch_operands = 0 : i64, tpu.core_type = #tpu.core_type<tc>, window_params = [{transform_indices = @transform_0, window_bounds = array<i64: 1, 8, 256>}, {pipeline_mode = #tpu.pipeline_mode<synchronous>, transform_indices = @transform_1, window_bounds = array<i64: 8, 72>}, {pipeline_mode = #tpu.pipeline_mode<synchronous>, transform_indices = @transform_2, window_bounds = array<i64: 8, 3>}, {transform_indices = @transform_3, window_bounds = array<i64: 1, 1, 1>}]} {
    %c0 = arith.constant 0 : index
    %c0_0 = arith.constant 0 : index
    %c0_1 = arith.constant 0 : index
    %0 = vector.load %arg1[%c0, %c0_0, %c0_1] : memref<1x8x256xf32, #tpu.memory_space<vmem>>, vector<1x8x256xf32>
    %1 = vector.shape_cast %0 : vector<1x8x256xf32> to vector<8x256xf32>
    %c0_2 = arith.constant 0 : index
    %c0_3 = arith.constant 0 : index
    %2 = vector.load %arg3[%c0_2, %c0_3] : memref<8x3xf32, #tpu.memory_space<vmem>>, vector<8x3xf32>
    %cst = arith.constant 0.000000e+00 : f32
    %3 = vector.broadcast %cst : f32 to vector<8x128xf32>
    %4 = tpu.concatenate %3, %1, %3 in 1 : vector<8x128xf32>, vector<8x256xf32>, vector<8x128xf32> -> vector<8x512xf32>
    %5 = tpu.iota {dimensions = array<i32: 1>} : vector<8x256xi32>
    %c16_i32 = arith.constant 16 : i32
    %c0_i32 = arith.constant 0 : i32
    %6 = arith.cmpi eq, %c16_i32, %c0_i32 : i32
    %c1_i32 = arith.constant 1 : i32
    %7 = arith.select %6, %c1_i32, %c16_i32 : i32
    %8 = vector.broadcast %7 : i32 to vector<8x256xi32>
    %9 = arith.remsi %5, %8 : vector<8x256xi32>
    %c0_i32_4 = arith.constant 0 : i32
    %10 = vector.broadcast %c0_i32_4 : i32 to vector<8x256xi32>
    %11 = arith.cmpi ne, %9, %10 : vector<8x256xi32>
    %c0_i32_5 = arith.constant 0 : i32
    %12 = vector.broadcast %c0_i32_5 : i32 to vector<8x256xi32>
    %13 = arith.cmpi slt, %9, %12 : vector<8x256xi32>
    %c0_i32_6 = arith.constant 0 : i32
    %14 = arith.cmpi slt, %7, %c0_i32_6 : i32
    %15 = vector.broadcast %14 : i1 to vector<8x256xi1>
    %16 = vector.broadcast %15 : vector<8x256xi1> to vector<8x256xi1>
    %17 = arith.xori %13, %16 : vector<8x256xi1>
    %18 = arith.andi %17, %11 : vector<8x256xi1>
    %19 = vector.broadcast %7 : i32 to vector<8x256xi32>
    %20 = arith.addi %9, %19 : vector<8x256xi32>
    %21 = arith.select %18, %20, %9 : vector<8x256xi1>, vector<8x256xi32>
    %22 = vector.extract_strided_slice %4 {offsets = [0, 111], sizes = [8, 256], strides = [1, 1]} : vector<8x512xf32> to vector<8x256xf32>
    %c1_i32_7 = arith.constant 1 : i32
    %23 = vector.broadcast %c1_i32_7 : i32 to vector<8x256xi32>
    %24 = arith.cmpi sge, %21, %23 : vector<8x256xi32>
    %cst_8 = arith.constant 0.000000e+00 : f32
    %25 = vector.broadcast %cst_8 : f32 to vector<8x256xf32>
    %26 = arith.select %24, %22, %25 : vector<8x256xi1>, vector<8x256xf32>
    %27 = vector.extract_strided_slice %4 {offsets = [0, 112], sizes = [8, 256], strides = [1, 1]} : vector<8x512xf32> to vector<8x256xf32>
    %28 = vector.extract_strided_slice %4 {offsets = [0, 113], sizes = [8, 256], strides = [1, 1]} : vector<8x512xf32> to vector<8x256xf32>
    %c15_i32 = arith.constant 15 : i32
    %29 = vector.broadcast %c15_i32 : i32 to vector<8x256xi32>
    %30 = arith.cmpi slt, %21, %29 : vector<8x256xi32>
    %cst_9 = arith.constant 0.000000e+00 : f32
    %31 = vector.broadcast %cst_9 : f32 to vector<8x256xf32>
    %32 = arith.select %30, %28, %31 : vector<8x256xi1>, vector<8x256xf32>
    %33 = vector.extract_strided_slice %4 {offsets = [0, 127], sizes = [8, 256], strides = [1, 1]} : vector<8x512xf32> to vector<8x256xf32>
    %c1_i32_10 = arith.constant 1 : i32
    %34 = vector.broadcast %c1_i32_10 : i32 to vector<8x256xi32>
    %35 = arith.cmpi sge, %21, %34 : vector<8x256xi32>
    %cst_11 = arith.constant 0.000000e+00 : f32
    %36 = vector.broadcast %cst_11 : f32 to vector<8x256xf32>
    %37 = arith.select %35, %33, %36 : vector<8x256xi1>, vector<8x256xf32>
    %38 = vector.extract_strided_slice %4 {offsets = [0, 128], sizes = [8, 256], strides = [1, 1]} : vector<8x512xf32> to vector<8x256xf32>
    %39 = vector.extract_strided_slice %4 {offsets = [0, 129], sizes = [8, 256], strides = [1, 1]} : vector<8x512xf32> to vector<8x256xf32>
    %c15_i32_12 = arith.constant 15 : i32
    %40 = vector.broadcast %c15_i32_12 : i32 to vector<8x256xi32>
    %41 = arith.cmpi slt, %21, %40 : vector<8x256xi32>
    %cst_13 = arith.constant 0.000000e+00 : f32
    %42 = vector.broadcast %cst_13 : f32 to vector<8x256xf32>
    %43 = arith.select %41, %39, %42 : vector<8x256xi1>, vector<8x256xf32>
    %44 = vector.extract_strided_slice %4 {offsets = [0, 143], sizes = [8, 256], strides = [1, 1]} : vector<8x512xf32> to vector<8x256xf32>
    %c1_i32_14 = arith.constant 1 : i32
    %45 = vector.broadcast %c1_i32_14 : i32 to vector<8x256xi32>
    %46 = arith.cmpi sge, %21, %45 : vector<8x256xi32>
    %cst_15 = arith.constant 0.000000e+00 : f32
    %47 = vector.broadcast %cst_15 : f32 to vector<8x256xf32>
    %48 = arith.select %46, %44, %47 : vector<8x256xi1>, vector<8x256xf32>
    %49 = vector.extract_strided_slice %4 {offsets = [0, 144], sizes = [8, 256], strides = [1, 1]} : vector<8x512xf32> to vector<8x256xf32>
    %50 = vector.extract_strided_slice %4 {offsets = [0, 145], sizes = [8, 256], strides = [1, 1]} : vector<8x512xf32> to vector<8x256xf32>
    %c15_i32_16 = arith.constant 15 : i32
    %51 = vector.broadcast %c15_i32_16 : i32 to vector<8x256xi32>
    %52 = arith.cmpi slt, %21, %51 : vector<8x256xi32>
    %cst_17 = arith.constant 0.000000e+00 : f32
    %53 = vector.broadcast %cst_17 : f32 to vector<8x256xf32>
    %54 = arith.select %52, %50, %53 : vector<8x256xi1>, vector<8x256xf32>
    %55 = tpu.concatenate %26, %27, %32, %37, %38, %43, %48, %49, %54 in 0 : vector<8x256xf32>, vector<8x256xf32>, vector<8x256xf32>, vector<8x256xf32>, vector<8x256xf32>, vector<8x256xf32>, vector<8x256xf32>, vector<8x256xf32>, vector<8x256xf32> -> vector<72x256xf32>
    %c0_18 = arith.constant 0 : index
    %c0_19 = arith.constant 0 : index
    %56 = vector.load %arg2[%c0_18, %c0_19] : memref<8x72xf32, #tpu.memory_space<vmem>>, vector<8x72xf32>
    %cst_20 = arith.constant dense<0.000000e+00> : vector<8x256xf32>
    %57 = tpu.matmul %56, %55, %cst_20 {dimension_numbers = #tpu.dot_dimension_numbers<[1], [0], [0], [1], [0, 0, 1, 1], [], []>} : vector<8x72xf32>, vector<72x256xf32>, vector<8x256xf32> -> vector<8x256xf32>
    %58 = vector.extract_strided_slice %2 {offsets = [0, 0], sizes = [8, 1], strides = [1, 1]} : vector<8x3xf32> to vector<8x1xf32>
    %59 = vector.broadcast %58 : vector<8x1xf32> to vector<8x256xf32>
    %60 = arith.addf %57, %59 : vector<8x256xf32>
    %cst_21 = arith.constant 0.000000e+00 : f32
    %61 = vector.broadcast %cst_21 : f32 to vector<8x256xf32>
    %62 = arith.cmpf oge, %60, %61 : vector<8x256xf32>
    %cst_22 = arith.constant 0.00999999977 : f32
    %63 = vector.broadcast %cst_22 : f32 to vector<8x256xf32>
    %64 = arith.mulf %63, %60 : vector<8x256xf32>
    %65 = arith.select %62, %60, %64 : vector<8x256xi1>, vector<8x256xf32>
    %66 = vector.extract_strided_slice %2 {offsets = [0, 1], sizes = [8, 1], strides = [1, 1]} : vector<8x3xf32> to vector<8x1xf32>
    %67 = vector.broadcast %66 : vector<8x1xf32> to vector<8x256xf32>
    %68 = arith.mulf %65, %67 : vector<8x256xf32>
    %cst_23 = arith.constant dense<0.000000e+00> : vector<8xf32>
    %69 = vector.multi_reduction <add>, %68, %cst_23 [1] : vector<8x256xf32> to vector<8xf32>
    %70 = vector.shape_cast %69 : vector<8xf32> to vector<8x1xf32>
    %cst_24 = arith.constant dense<0.000000e+00> : vector<1xf32>
    %71 = vector.multi_reduction <add>, %70, %cst_24 [0] : vector<8x1xf32> to vector<1xf32>
    %72 = vector.shape_cast %71 : vector<1xf32> to vector<1x1xf32>
    %cst_25 = arith.constant 3.906250e-03 : f32
    %73 = vector.broadcast %cst_25 : f32 to vector<1x1xf32>
    %74 = arith.mulf %72, %73 : vector<1x1xf32>
    %75 = vector.extract_strided_slice %2 {offsets = [0, 2], sizes = [1, 1], strides = [1, 1]} : vector<8x3xf32> to vector<1x1xf32>
    %76 = arith.addf %74, %75 : vector<1x1xf32>
    %77 = arith.negf %76 : vector<1x1xf32>
    %78 = math.exp %77 : vector<1x1xf32>
    %cst_26 = arith.constant 1.000000e+00 : f32
    %79 = vector.broadcast %cst_26 : f32 to vector<1x1xf32>
    %80 = arith.addf %79, %78 : vector<1x1xf32>
    %81 = arith.divf %79, %80 : vector<1x1xf32>
    %82 = vector.shape_cast %81 : vector<1x1xf32> to vector<1x1x1xf32>
    %c0_27 = arith.constant 0 : index
    %c0_28 = arith.constant 0 : index
    %c0_29 = arith.constant 0 : index
    %83 = vector.load %arg4[%c0_27, %c0_28, %c0_29] : memref<1x1x1xf32, #tpu.memory_space<vmem>>, vector<1x1x1xf32>
    tpu.vector_store %arg4[%c0_27, %c0_28, %c0_29], %82 {strides = array<i32>} : memref<1x1x1xf32, #tpu.memory_space<vmem>>, vector<1x1x1xf32>,
    return
  }
  func.func @transform_0(%arg0: i32) -> (i32, i32, i32) {
    %c0_i32 = arith.constant 0 : i32
    %c0_i32_0 = arith.constant 0 : i32
    %c0_i32_1 = arith.constant 0 : i32
    return %arg0, %c0_i32, %c0_i32_0 : i32, i32, i32
  }
  func.func @transform_1(%arg0: i32) -> (i32, i32) {
    %c0_i32 = arith.constant 0 : i32
    %c0_i32_0 = arith.constant 0 : i32
    %c0_i32_1 = arith.constant 0 : i32
    return %c0_i32, %c0_i32_0 : i32, i32
  }
  func.func @transform_2(%arg0: i32) -> (i32, i32) {
    %c0_i32 = arith.constant 0 : i32
    %c0_i32_0 = arith.constant 0 : i32
    %c0_i32_1 = arith.constant 0 : i32
    return %c0_i32, %c0_i32_0 : i32, i32
  }
  func.func @transform_3(%arg0: i32) -> (i32, i32, i32) {
    %c0_i32 = arith.constant 0 : i32
    %c0_i32_0 = arith.constant 0 : i32
    %c0_i32_1 = arith.constant 0 : i32
    return %arg0, %c0_i32, %c0_i32_0 : i32, i32, i32
  }
}

</mosaic_0001>

<llo_original>
// kernel: instance_counter_forward.1
$region0: #{instance_counter_forward.1}
  #allocation0 [shape = 'u32[]', space=smem, size = 0x4, offset = 0x4, fixed_abs, tag = 'smem constant byte address 0x4 - core index']
  #allocation1 [shape = 'u32[144,128]{1,0:T(1,128)}', space=vmem, size = 0x12000, scoped, tag = 'internal scratch']
  %s0 = inlined_call_operand.vmem [shape: f32[2,8,256], index: 0, kind: input, shape index: {}]
  %s1 = inlined_call_operand.vmem [shape: f32[8,72], index: 1, kind: input, shape index: {}]
  %s2 = inlined_call_operand.vmem [shape: f32[8,3], index: 2, kind: input, shape index: {}]
  %s3 = inlined_call_operand.vmem [shape: f32[2,1,1], index: 3, kind: output, shape index: {}]
  %s4 = sld [smem:[#allocation0]]
  $region45: #{instance_counter_forward.1} parent=0
    _
  %s6 = ssub.s32 1, %s4
  %s7 = scalar_select 0, %s6, %s4
  loop: start=0, step=1, limit=4
  $region2: #{instance_counter_forward.1} parent=0 // loop_pre_header
    _
  $region3: #{instance_counter_forward.1} parent=0 // loop_header
    %s9 = sphi 0, %s13
    %p10 = scmp.ge.s32.totalorder %s9, 4
    %s19 = sphi 0, %s21
    %s22 = sphi 0, %s19
    %s23 = sphi 0, %s22
    %s39 = sphi 0, %s23
    %s43 = sphi 0, %s43
    %s45 = sphi 0, %s43
    %s46 = sphi 0, %s45
    %s60 = sphi 0, %s46
    %s64 = sphi 0, %s64
    %s66 = sphi 0, %s64
    %s67 = sphi 0, %s66
    %s81 = sphi 0, %s67
    %s87 = sphi 0, %s89
    %s90 = sphi 0, %s87
    %s91 = sphi 0, %s90
    %s107 = sphi 0, %s91
  $region4: #{instance_counter_forward.1} parent=0 // loop_header_branch
    %12 = sbr.rel (%p10) target = $region8
  $region5: #{instance_counter_forward.1} parent=0 // loop_body
    %s14 = ssub.s32 %s9, 1
    %s15 = ssub.s32 %s9, 2
    %s16 = sadd.s32 %s9, 1
    %s17 = ssub.s32 %s9, %s16
    %p18 = scmp.eq.s32.totalorder %s17, 0
    %s20 = sadd.s32 %s19, 1
    %s21 = scalar_select %p18, %s19, %s20
    %p24 = pneg %p18
    %p25 = scmp.eq.s32.totalorder %s9, 1
    %p26 = por %p24, %p25
    %p27 = scmp.ne.s32.totalorder %s19, %s22
    %p28 = scmp.eq.s32.totalorder %s9, 0
    %p29 = por %p27, %p28
    %p30 = scmp.ne.s32.totalorder %s19, %s22
    %p31 = scmp.eq.s32.totalorder %s14, 1
    %p32 = por %p30, %p31
    %p33 = scmp.ne.s32.totalorder %s22, %s23
    %p34 = scmp.eq.s32.totalorder %s14, 0
    %p35 = por %p33, %p34
    %p36 = scmp.ne.s32.totalorder %s22, %s23
    %p37 = scmp.eq.s32.totalorder %s15, 1
    %p38 = por %p36, %p37
    %p40 = scmp.ne.s32.totalorder %s23, %s39
    %p41 = scmp.eq.s32.totalorder %s15, 0
    %p42 = por %p40, %p41
    %s44 = sadd.s32 %s43, 1
    %p47 = scmp.eq.s32.totalorder %s9, 1
    %p48 = scmp.ne.s32.totalorder %s43, %s45
    %p49 = scmp.eq.s32.totalorder %s9, 0
    %p50 = por %p48, %p49
    %p51 = scmp.ne.s32.totalorder %s43, %s45
    %p52 = scmp.eq.s32.totalorder %s14, 1
    %p53 = por %p51, %p52
    %p54 = scmp.ne.s32.totalorder %s45, %s46
    %p55 = scmp.eq.s32.totalorder %s14, 0
    %p56 = por %p54, %p55
    %p57 = scmp.ne.s32.totalorder %s45, %s46
    %p58 = scmp.eq.s32.totalorder %s15, 1
    %p59 = por %p57, %p58
    %p61 = scmp.ne.s32.totalorder %s46, %s60
    %p62 = scmp.eq.s32.totalorder %s15, 0
    %p63 = por %p61, %p62
    %s65 = sadd.s32 %s64, 1
    %p68 = scmp.eq.s32.totalorder %s9, 1
    %p69 = scmp.ne.s32.totalorder %s64, %s66
    %p70 = scmp.eq.s32.totalorder %s9, 0
    %p71 = por %p69, %p70
    %p72 = scmp.ne.s32.totalorder %s64, %s66
    %p73 = scmp.eq.s32.totalorder %s14, 1
    %p74 = por %p72, %p73
    %p75 = scmp.ne.s32.totalorder %s66, %s67
    %p76 = scmp.eq.s32.totalorder %s14, 0
    %p77 = por %p75, %p76
    %p78 = scmp.ne.s32.totalorder %s66, %s67
    %p79 = scmp.eq.s32.totalorder %s15, 1
    %p80 = por %p78, %p79
    %p82 = scmp.ne.s32.totalorder %s67, %s81
    %p83 = scmp.eq.s32.totalorder %s15, 0
    %p84 = por %p82, %p83
    %s85 = ssub.s32 %s9, %s16
    %p86 = scmp.eq.s32.totalorder %s85, 0
    %s88 = sadd.s32 %s87, 1
    %s89 = scalar_select %p86, %s87, %s88
    %p92 = pneg %p86
    %p93 = scmp.eq.s32.totalorder %s9, 1
    %p94 = por %p92, %p93
    %p95 = scmp.ne.s32.totalorder %s87, %s90
    %p96 = scmp.eq.s32.totalorder %s9, 0
    %p97 = por %p95, %p96
    %p98 = scmp.ne.s32.totalorder %s87, %s90
    %p99 = scmp.eq.s32.totalorder %s14, 1
    %p100 = por %p98, %p99
    %p101 = scmp.ne.s32.totalorder %s90, %s91
    %p102 = scmp.eq.s32.totalorder %s14, 0
    %p103 = por %p101, %p102
    %p104 = scmp.ne.s32.totalorder %s90, %s91
    %p105 = scmp.eq.s32.totalorder %s15, 1
    %p106 = por %p104, %p105
    %p108 = scmp.ne.s32.totalorder %s91, %s107
    %p109 = scmp.eq.s32.totalorder %s15, 0
    %p110 = por %p108, %p109
    %p111 = scmp.le.s32.totalorder 1, %s9
    %p112 = scmp.lt.s32.totalorder %s9, 3
    %p113 = pnand %p111, %p112
    %p114 = pneg %p113
    // Predicated region
    $region9: #{instance_counter_forward.1} parent=5 // pred_check
      _
    $region10: #{instance_counter_forward.1} parent=5 // pred_check_branch
      %116 = sbr.rel (%p113) target = $region12
    $region11: #{instance_counter_forward.1} parent=5 // pred_region
      %s117 = ssub.s32 %s9, 1
      // Predicated region
      $region13: #{instance_counter_forward.1} parent=11 // pred_check
        %p118 = pneg %p56
      $region14: #{instance_counter_forward.1} parent=11 // pred_check_branch
        %120 = sbr.rel (%p118) target = $region16
      $region15: #{instance_counter_forward.1} parent=11 // pred_region
        _
      $region16: #{instance_counter_forward.1} parent=11 // pred_fallthru
        _
      // Predicated region
      $region17: #{instance_counter_forward.1} parent=11 // pred_check
        %p121 = pneg %p77
      $region18: #{instance_counter_forward.1} parent=11 // pred_check_branch
        %123 = sbr.rel (%p121) target = $region20
      $region19: #{instance_counter_forward.1} parent=11 // pred_region
        _
      $region20: #{instance_counter_forward.1} parent=11 // pred_fallthru
        _
    $region12: #{instance_counter_forward.1} parent=5 // pred_fallthru
      _
    %p124 = scmp.lt.s32.totalorder %s9, 2
    // Predicated region
    $region21: #{instance_counter_forward.1} parent=5 // pred_check
      %p125 = pneg %p124
    $region22: #{instance_counter_forward.1} parent=5 // pred_check_branch
      %127 = sbr.rel (%p125) target = $region24
    $region23: #{instance_counter_forward.1} parent=5 // pred_region
      // Predicated region
      $region25: #{instance_counter_forward.1} parent=23 // pred_check
        %p128 = pneg %p29
      $region26: #{instance_counter_forward.1} parent=23 // pred_check_branch
        %130 = sbr.rel (%p128) target = $region28
      $region27: #{instance_counter_forward.1} parent=23 // pred_region
        %p131 = scmp.lt.s32.totalorder %s9, 1
        %s132 = scalar_select %p131, %s9, 1
        %s133 = smul.addr %s132, 2
        %s134 = smul.addr %s133, 8
        %s135 = scalar_lea.vmem %s0, %s134
      $region28: #{instance_counter_forward.1} parent=23 // pred_fallthru
        _
    $region24: #{instance_counter_forward.1} parent=5 // pred_fallthru
      _
    %p136 = scmp.le.s32.totalorder 1, %s9
    %p137 = scmp.lt.s32.totalorder %s9, 3
    %p138 = pnand %p136, %p137
    %p139 = pneg %p138
    // Predicated region
    $region29: #{instance_counter_forward.1} parent=5 // pred_check
      _
    $region30: #{instance_counter_forward.1} parent=5 // pred_check_branch
      %141 = sbr.rel (%p138) target = $region32
    $region31: #{instance_counter_forward.1} parent=5 // pred_region
      %s142 = ssub.s32 %s9, 1
      %p143 = scmp.lt.s32.totalorder %s14, 1
      %s144 = scalar_select %p143, %s14, 1
      %s145 = smul.addr %s144, 2
      %s146 = smul.addr %s145, 8
      %s147 = scalar_lea.vmem %s0, %s146
      %p148 = pneg %p35
      %p149 = pneg %p32
      %p150 = pneg %p56
      %p151 = pneg %p53
      %p152 = pneg %p77
      %p153 = pneg %p74
      %p154 = pneg %p103
      %p155 = pneg %p100
      %p156 = scmp.lt.s32.totalorder %s14, 1
      %s157 = scalar_select %p156, %s14, 1
      %s158 = scalar_lea.vmem %s3, %s157
      %p159 = scmp.lt.s32.totalorder %s14, 1
      %s160 = scalar_select %p159, %s14, 1
      %s161 = smul.addr %s160, 2
      %s162 = smul.addr %s161, 8
      %s163 = scalar_lea.vmem %s0, %s162
      %p164 = scmp.lt.s32.totalorder %s14, 1
      %s165 = scalar_select %p164, %s14, 1
      %s166 = scalar_lea.vmem %s3, %s165
      %v167 = vld [vmem:[%s163] sm:$0xff]
      %v168 = vld [vmem:[%s163 + $0x8] sm:$0xff]
      %v169 = vld [vmem:[%s2] sm:$0xff]
      %v170 = vlaneseq
      %v171 = vand.u32 %v170, 127
      %v172 = vadd.s32 %v171, 128
      %vm173 = vcmp.lt.s32.totalorder %v171, 0
      %v174 = vsub.s32 0, %v171
      %v175 = vsel %vm173, %v174, %v171
      %v176 = vshrl.u32 %v175, 4
      %v177 = vand.u32 %v175, 15
      %v178 = vsub.s32 0, %v177
      %v179 = vsel %vm173, %v178, %v177
      %vm180 = vcmp.lt.s32.totalorder %v172, 0
      %v181 = vsub.s32 0, %v172
      %v182 = vsel %vm180, %v181, %v172
      %v183 = vshrl.u32 %v182, 4
      %v184 = vand.u32 %v182, 15
      %v185 = vsub.s32 0, %v184
      %v186 = vsel %vm180, %v185, %v184
      %vm187 = vcmp.ne.s32.totalorder %v179, 0
      %vm188 = vcmp.ne.s32.totalorder %v186, 0
      %vm189 = vcmp.lt.s32.totalorder %v179, 0
      %vm190 = vcmp.lt.s32.totalorder %v186, 0
      %vm191 = vmand %vm189, %vm187
      %vm192 = vmand %vm190, %vm188
      %v193 = vadd.s32 %v179, 16
      %v194 = vadd.s32 %v186, 16
      %v195 = vsel %vm191, %v193, %v179
      %v196 = vsel %vm192, %v194, %v186
      %vm197 = vcmp.ge.s32.totalorder %v195, 1
      %vm198 = vcmp.ge.s32.totalorder %v196, 1
      %202 = vrot.lane.b32.xlu0 0.0, 17
      %v203 = vpop.permute.xlu0 %202
      %204 = vrot.lane.b32.xlu0 %v167, 17
      %v205 = vpop.permute.xlu0 %204
      %206 = vrot.lane.b32.xlu0 %v168, 17
      %v207 = vpop.permute.xlu0 %206
      %vm208 = vcmask 138240
      %v209 = vsel %vm208, %v203, %v205
      %v210 = vsel %vm208, %v205, %v207
      %v213 = vsel %vm197, %v209, 0.0
      %v214 = vsel %vm198, %v210, 0.0
      %vm215 = vcmp.lt.s32.totalorder %v195, 15
      %vm216 = vcmp.lt.s32.totalorder %v196, 15
      %217 = vrot.lane.b32.xlu0 0.0, 15
      %v218 = vpop.permute.xlu0 %217
      %219 = vrot.lane.b32.xlu0 %v167, 15
      %v220 = vpop.permute.xlu0 %219
      %221 = vrot.lane.b32.xlu0 %v168, 15
      %v222 = vpop.permute.xlu0 %221
      %vm223 = vcmask 121856
      %v224 = vsel %vm223, %v218, %v220
      %v225 = vsel %vm223, %v220, %v222
      %v228 = vsel %vm215, %v224, 0.0
      %v229 = vsel %vm216, %v225, 0.0
      %230 = vrot.lane.b32.xlu0 0.0, 1
      %v231 = vpop.permute.xlu0 %230
      %232 = vrot.lane.b32.xlu0 %v167, 1
      %v233 = vpop.permute.xlu0 %232
      %234 = vrot.lane.b32.xlu0 %v168, 1
      %v235 = vpop.permute.xlu0 %234
      %vm236 = vcmask 7168
      %v237 = vsel %vm236, %v231, %v233
      %v238 = vsel %vm236, %v233, %v235
      %v241 = vsel %vm197, %v237, 0.0
      %v242 = vsel %vm198, %v238, 0.0
      %243 = vrot.lane.b32.xlu0 %v167, 127
      %v244 = vpop.permute.xlu0 %243
      %245 = vrot.lane.b32.xlu0 %v168, 127
      %v246 = vpop.permute.xlu0 %245
      %247 = vrot.lane.b32.xlu0 0.0, 127
      %v248 = vpop.permute.xlu0 %247
      %vm249 = vcmask 1039360
      %v250 = vsel %vm249, %v244, %v246
      %v251 = vsel %vm249, %v246, %v248
      %v254 = vsel %vm215, %v250, 0.0
      %v255 = vsel %vm216, %v251, 0.0
      %256 = vrot.lane.b32.xlu0 %v167, 113
      %v257 = vpop.permute.xlu0 %256
      %258 = vrot.lane.b32.xlu0 %v168, 113
      %v259 = vpop.permute.xlu0 %258
      %260 = vrot.lane.b32.xlu0 0.0, 113
      %v261 = vpop.permute.xlu0 %260
      %vm262 = vcmask 924672
      %v263 = vsel %vm262, %v257, %v259
      %v264 = vsel %vm262, %v259, %v261
      %v267 = vsel %vm197, %v263, 0.0
      %v268 = vsel %vm198, %v264, 0.0
      %269 = vrot.lane.b32.xlu0 %v167, 111
      %v270 = vpop.permute.xlu0 %269
      %271 = vrot.lane.b32.xlu0 %v168, 111
      %v272 = vpop.permute.xlu0 %271
      %273 = vrot.lane.b32.xlu0 0.0, 111
      %v274 = vpop.permute.xlu0 %273
      %vm275 = vcmask 908288
      %v276 = vsel %vm275, %v270, %v272
      %v277 = vsel %vm275, %v272, %v274
      %v280 = vsel %vm215, %v276, 0.0
      %v281 = vsel %vm216, %v277, 0.0
      %282 = vrot.lane.b32.xlu0 0.0, 16
      %v283 = vpop.permute.xlu0 %282
      %284 = vrot.lane.b32.xlu0 %v167, 16
      %v285 = vpop.permute.xlu0 %284
      %286 = vrot.lane.b32.xlu0 %v168, 16
      %v287 = vpop.permute.xlu0 %286
      %vm288 = vcmask 130048
      %v289 = vsel %vm288, %v283, %v285
      %v290 = vsel %vm288, %v285, %v287
      %293 = vrot.lane.b32.xlu0 %v167, 112
      %v294 = vpop.permute.xlu0 %293
      %295 = vrot.lane.b32.xlu0 %v168, 112
      %v296 = vpop.permute.xlu0 %295
      %297 = vrot.lane.b32.xlu0 0.0, 112
      %v298 = vpop.permute.xlu0 %297
      %vm299 = vcmask 916480
      %v300 = vsel %vm299, %v294, %v296
      %v301 = vsel %vm299, %v296, %v298
      %v304 = vld [vmem:[%s1] sm:$0xff]
      %306 = vset.pattern.permute.xlu0 0
      %307 = vperm.xlu0 %306, %v169
      %v308 = vpop.permute.xlu0 %307
      %vm310 = vcmask 588800
      %v312 = vsel %vm310, %v304, 0
      %314 = vmatprep.subr.mxu0 0.0
      %315 = vmatpush1.msra.mxu0 0.0
      %316 = vmatprep.subr.mxu0 0.0
      %317 = vmatpush1.msra.mxu0 0.0
      %318 = vmatprep.subr.mxu0 0.0
      %319 = vmatpush1.msra.mxu0 0.0
      %320 = vmatprep.subr.mxu0 0.0
      %321 = vmatpush1.msra.mxu0 0.0
      %322 = vmatprep.subr.mxu0 0.0
      %323 = vmatpush1.msra.mxu0 0.0
      %324 = vmatprep.subr.mxu0 0.0
      %325 = vmatpush1.msra.mxu0 0.0
      %326 = vmatprep.subr.mxu0 0.0
      %327 = vmatpush1.msra.mxu0 0.0
      %328 = vmatprep.subr.mxu0 %v281
      %329 = vmatpush1.msra.mxu0 %v280
      %330 = vmatprep.subr.mxu0 %v301
      %331 = vmatpush1.msra.mxu0 %v300
      %332 = vmatprep.subr.mxu0 %v268
      %333 = vmatpush1.msra.mxu0 %v267
      %334 = vmatprep.subr.mxu0 %v255
      %335 = vmatpush1.msra.mxu0 %v254
      %336 = vmatprep.subr.mxu0 %v168
      %337 = vmatpush1.msra.mxu0 %v167
      %338 = vmatprep.subr.mxu0 %v242
      %339 = vmatpush1.msra.mxu0 %v241
      %340 = vmatprep.subr.mxu0 %v229
      %341 = vmatpush1.msra.mxu0 %v228
      %342 = vmatprep.subr.mxu0 %v290
      %343 = vmatpush1.msra.mxu0 %v289
      %344 = vmatprep.subr.mxu0 %v214
      %345 = vmatpush1.msra.mxu0 %v213
      %346 = vmatprep.subr.mxu0 0.0
      %347 = vmatpush2.msra.mxu0 0.0
      %348 = vmatprep.subr.mxu0 0.0
      %349 = vmatpush2.msra.mxu0 0.0
      %350 = vmatprep.subr.mxu0 0.0
      %351 = vmatpush2.msra.mxu0 0.0
      %352 = vmatprep.subr.mxu0 0.0
      %353 = vmatpush2.msra.mxu0 0.0
      %354 = vmatprep.subr.mxu0 0.0
      %355 = vmatpush2.msra.mxu0 0.0
      %356 = vmatprep.subr.mxu0 0.0
      %357 = vmatpush2.msra.mxu0 0.0
      %358 = vmatprep.subr.mxu0 0.0
      %359 = vmatpush2.msra.mxu0 0.0
      %360 = vmatprep.subr.mxu0 0.0
      %361 = vmatpush2.msra.mxu0 0.0
      %362 = vmatprep.subr.mxu0 0.0
      %363 = vmatpush2.msra.mxu0 0.0
      %364 = vmatprep.subr.mxu0 0.0
      %365 = vmatpush2.msra.mxu0 0.0
      %366 = vmatprep.subr.mxu0 0.0
      %367 = vmatpush2.msra.mxu0 0.0
      %368 = vmatprep.subr.mxu0 0.0
      %369 = vmatpush2.msra.mxu0 0.0
      %370 = vmatprep.subr.mxu0 0.0
      %371 = vmatpush2.msra.mxu0 0.0
      %372 = vmatprep.subr.mxu0 0.0
      %373 = vmatpush2.msra.mxu0 0.0
      %374 = vmatprep.subr.mxu0 0.0
      %375 = vmatpush2.msra.mxu0 0.0
      %376 = vmatprep.subr.mxu0 0.0
      %377 = vmatpush2.msra.mxu0 0.0
      %378 = vmatprep.mubr.f32.mxu0 0.0
      %379 = vmatmul.mubr.f32.gmra.mxu0 %v312
      %v380 = vpop.f32.mrf.mxu0
      %v381 = vadd.f32 %v308, %v380
      %v382 = vpop.f32.mrf.mxu0
      %v383 = vadd.f32 %v308, %v382
      %384 = vdwg.mxu0
      %vm385 = vcmp.ge.f32.partialorder %v381, 0.0
      %vm386 = vcmp.ge.f32.partialorder %v383, 0.0
      %v387 = vmul.f32 %v381, 0.01
      %v388 = vmul.f32 %v383, 0.01
      %v389 = vsel %vm385, %v381, %v387
      %v390 = vsel %vm386, %v383, %v388
      %391 = vset.pattern.permute.xlu0 1
      %392 = vperm.xlu0 %391, %v169
      %v393 = vpop.permute.xlu0 %392
      %v395 = vmul.f32 %v389, %v393
      %v396 = vmul.f32 %v390, %v393
      %v397 = vadd.f32 %v395, %v396
      %398 = vadd.xlane.f32.xlu0 %v397
      %v399 = vpop.xlane.xlu0 %398
      %v400 = vrot.slane %v399, 4
      %v401 = vadd.f32 %v399, %v400
      %v402 = vrot.slane %v401, 2
      %v403 = vadd.f32 %v401, %v402
      %v404 = vrot.slane %v403, 1
      %v405 = vadd.f32 %v403, %v404
      %v406 = vmul.f32 %v405, 0.00390625
      %v407 = vadd.f32 %v406, %v169
      %v408 = vxor.u32 %v407, 2147483648
      %v409 = vmul.f32 %v408, 1.442695
      %v410 = vpow.pop %v409
      %v411 = vadd.f32 %v410, 1.0
      %v412 = vrcp.pop %v411
      %v413 = vmul.f32 1.0, %v412
      %415 = vrot.lane.b32.xlu0 %v413, 126
      %v416 = vpop.permute.xlu0 %415
      %vm418 = vcmask 0
      %419 = vst.msk [vmem:[%s166] sm:$0x1] %vm418, %v416
      %p420 = scmp.lt.s32.totalorder %s14, 1
      %s421 = scalar_select %p420, %s14, 1
      %s422 = scalar_lea.vmem %s3, %s421
      // Predicated region
      $region33: #{instance_counter_forward.1} parent=31 // pred_check
        %p423 = pneg %p100
      $region34: #{instance_counter_forward.1} parent=31 // pred_check_branch
        %425 = sbr.rel (%p423) target = $region36
      $region35: #{instance_counter_forward.1} parent=31 // pred_region
        _
      $region36: #{instance_counter_forward.1} parent=31 // pred_fallthru
        _
    $region32: #{instance_counter_forward.1} parent=5 // pred_fallthru
      _
    %p426 = scmp.le.s32.totalorder 2, %s9
    // Predicated region
    $region37: #{instance_counter_forward.1} parent=5 // pred_check
      %p427 = pneg %p426
    $region38: #{instance_counter_forward.1} parent=5 // pred_check_branch
      %429 = sbr.rel (%p427) target = $region40
    $region39: #{instance_counter_forward.1} parent=5 // pred_region
      %s430 = ssub.s32 %s9, 2
      // Predicated region
      $region41: #{instance_counter_forward.1} parent=39 // pred_check
        %p431 = pneg %p106
      $region42: #{instance_counter_forward.1} parent=39 // pred_check_branch
        %433 = sbr.rel (%p431) target = $region44
      $region43: #{instance_counter_forward.1} parent=39 // pred_region
        %p434 = scmp.lt.s32.totalorder %s15, 1
        %s435 = scalar_select %p434, %s15, 1
        %s436 = scalar_lea.vmem %s3, %s435
      $region44: #{instance_counter_forward.1} parent=39 // pred_fallthru
        _
    $region40: #{instance_counter_forward.1} parent=5 // pred_fallthru
      _
  $region6: #{instance_counter_forward.1} parent=0 // loop_footer
    %s13 = sadd.s32 1, %s9
  $region7: #{instance_counter_forward.1} parent=0 // loop_footer_branch
    %8 = sbr.rel target = $region3
  $region8: #{instance_counter_forward.1} parent=0 // loop_exit
    _

</llo_original>
